<compile_context>
chip_gen: v7x
topology: tpu7x:2x2x1
jax: 0.10.0
libtpu: 0.0.40
codegen_flags: <defaults>
</compile_context>

<pallas_src>
import jax
import jax.numpy as jnp
from jax.experimental import pallas as pl
from jax.experimental.pallas import tpu as pltpu


def _round_up(x, m):
    return ((x + m - 1) // m) * m


def _embed_highway_kernel(ids_ref, table_ref, w0_ref, b0_ref, w1_ref, b1_ref,
                          out_ref, x_vmem, sem):
    # ids_ref:   (n_pad,) int32 in SMEM (scalar prefetch)
    # table_ref: (V, Hp) f32 in HBM (pre-projected word vectors, lane-padded)
    # w{0,1}:    (Hp, 2Hp) bf16 resident in VMEM  -- concat([Wg | Wt], axis=1)
    # b{0,1}:    (1, 2Hp) f32 resident in VMEM    -- concat([bg | bt])
    # out_ref:   (tm, Hp) bf16 streamed output tile
    # x_vmem:    (tm, Hp) f32 scratch for the gathered rows
    tm, Hp = out_ref.shape
    base = pl.program_id(0) * tm

    # Fused gather: DMA this tile's rows straight from the HBM table into VMEM
    # (no (N, H) intermediate round trip through HBM).  All tm copies are in
    # flight concurrently on one semaphore; each row is a 32-bit-aligned
    # contiguous (Hp,) f32 slab, so both src and dst slices are trivial.
    @pl.loop(0, tm)
    def _issue(r):
        pltpu.make_async_copy(table_ref.at[ids_ref[base + r]],
                              x_vmem.at[r], sem.at[0]).start()

    @pl.loop(0, tm)
    def _drain(r):
        pltpu.make_async_copy(table_ref.at[0], x_vmem.at[r], sem.at[0]).wait()

    x = x_vmem[...]                                   # (tm, Hp) f32 residual path

    # Highway layer 0: one fused gate+transform matmul, bf16 MXU / f32 acc,
    # all elementwise math kept in f32 (v5e has no bf16 VPU/EUP path).
    gt = jnp.dot(x.astype(jnp.bfloat16), w0_ref[...],
                 preferred_element_type=jnp.float32) + b0_ref[...]
    g = jax.nn.sigmoid(gt[:, :Hp])
    t = jnp.maximum(gt[:, Hp:], 0.0)
    x = g * t + (1.0 - g) * x

    # Highway layer 1
    gt = jnp.dot(x.astype(jnp.bfloat16), w1_ref[...],
                 preferred_element_type=jnp.float32) + b1_ref[...]
    g = jax.nn.sigmoid(gt[:, :Hp])
    t = jnp.maximum(gt[:, Hp:], 0.0)
    x = g * t + (1.0 - g) * x

    out_ref[...] = x.astype(out_ref.dtype)


def prepare_embedding_params(word_vectors, w_proj, wt, bt, wg, bg):
    """Pre-compute kernel-side parameters.  Call ONCE per weight update (or at
    model load); the result is reused by every embedding_forward call so the
    V*E*H projection is not paid per forward."""
    H = w_proj.shape[1]
    Hp = _round_up(H, 128)   # lane-dense hidden dim for the kernel path

    # Pre-project the table once: (V, E) @ (E, H) -> (V, H).  Since eval-mode
    # dropout is identity, gather∘project == project∘gather, so gathering from
    # the projected table is exact.  Kept in f32 so each gathered row is a
    # 32-bit aligned DMA (bf16 cast happens at the MXU inputs inside the kernel).
    table = jnp.dot(word_vectors.astype(jnp.float32), w_proj.astype(jnp.float32))
    table = jnp.pad(table, ((0, 0), (0, Hp - H)))                  # (V, Hp) f32

    # Fused, lane-padded highway weights: [Wg | Wt] -> (Hp, 2Hp) bf16,
    # [bg | bt] -> (1, 2Hp) f32.  Padding rows/cols are zero, so the padded
    # activation columns stay exactly zero through both highway layers.
    def fuse(layer):
        w = jnp.zeros((Hp, 2 * Hp), jnp.float32)
        w = w.at[:H, :H].set(wg[layer])
        w = w.at[:H, Hp:Hp + H].set(wt[layer])
        b = jnp.zeros((1, 2 * Hp), jnp.float32)
        b = b.at[0, :H].set(bg[layer])
        b = b.at[0, Hp:Hp + H].set(bt[layer])
        return w.astype(jnp.bfloat16), b

    w0, b0 = fuse(0)
    w1, b1 = fuse(1)
    return dict(table=table, w0=w0, b0=b0, w1=w1, b1=b1, hidden=H)


def embedding_forward(token_ids, params, drop_prob=0.0, training=False,
                      block_rows=2048):
    """token_ids: (B, S) int32; params: output of prepare_embedding_params.
    Returns (B, S, H) bf16."""
    if training and drop_prob > 0.0:
        # TODO(synk): training-mode dropout (random mask) not implemented; the
        # pre-projected table trick is only exact when dropout is identity.
        raise NotImplementedError("training-mode dropout not supported")

    table = params["table"]
    w0, b0, w1, b1 = params["w0"], params["b0"], params["w1"], params["b1"]
    H = params["hidden"]
    Hp = table.shape[1]

    B, S = token_ids.shape
    N = B * S

    # Row tile: multiple of 16 (bf16 packs 2 rows/sublane), large by default,
    # but never so large that small-N cases collapse to a single grid step
    # (keep >= 2 steps where possible so both v7x TensorCores get work).
    tm = min(_round_up(block_rows, 16), max(16, _round_up(pl.cdiv(N, 2), 16)))
    n_tiles = pl.cdiv(N, tm)
    n_pad = n_tiles * tm

    ids = token_ids.reshape(-1).astype(jnp.int32)
    if n_pad != N:
        # Padded rows gather row 0 (always a valid index) and are sliced off.
        ids = jnp.pad(ids, (0, n_pad - N))

    # Per-step VMEM footprint: resident (double-buffered) weights, streamed
    # (double-buffered) bf16 output tile, f32 gather scratch, plus headroom.
    # Capped well below v7x's 64 MiB per-core VMEM.
    weight_bytes = 2 * 2 * (Hp * 2 * Hp * 2 + 2 * Hp * 4)
    out_bytes = 2 * tm * Hp * 2
    scratch_bytes = tm * Hp * 4
    vmem_limit = int(min(48 * 1024 * 1024,
                         max(32 * 1024 * 1024,
                             weight_bytes + out_bytes + scratch_bytes + (4 << 20))))

    flops = 2 * (2 * n_pad * Hp * (2 * Hp))          # 2 highway layers, fused matmul
    transcendentals = 2 * n_pad * Hp                 # sigmoids
    bytes_accessed = (n_pad * Hp * 4                 # gathered table rows (read)
                      + n_pad * Hp * 2               # bf16 output (write)
                      + 2 * (w0.size * 2 + b0.size * 4)
                      + n_pad * 4)                   # token ids

    const_spec = lambda shape: pl.BlockSpec(shape, lambda i, ids: (0, 0))

    out = pl.pallas_call(
        _embed_highway_kernel,
        out_shape=jax.ShapeDtypeStruct((n_pad, Hp), jnp.bfloat16),
        grid_spec=pltpu.PrefetchScalarGridSpec(
            num_scalar_prefetch=1,
            grid=(n_tiles,),
            in_specs=[
                pl.BlockSpec(memory_space=pl.ANY),        # projected table (HBM)
                const_spec((Hp, 2 * Hp)),                 # layer-0 fused W (resident)
                const_spec((1, 2 * Hp)),                  # layer-0 fused b
                const_spec((Hp, 2 * Hp)),                 # layer-1 fused W
                const_spec((1, 2 * Hp)),                  # layer-1 fused b
            ],
            out_specs=pl.BlockSpec((tm, Hp), lambda i, ids: (i, 0)),
            scratch_shapes=[
                pltpu.VMEM((tm, Hp), jnp.float32),        # gathered rows
                pltpu.SemaphoreType.DMA((1,)),
            ]),
        compiler_params=pltpu.CompilerParams(
            dimension_semantics=("parallel",),
            vmem_limit_bytes=vmem_limit),
        cost_estimate=pl.CostEstimate(flops=flops,
                                      transcendentals=transcendentals,
                                      bytes_accessed=bytes_accessed),
    )(ids, table, w0, b0, w1, b1)

    return out[:N, :H].reshape(B, S, H)


def _reference_forward(token_ids, word_vectors, w_proj, wt, bt, wg, bg):
    """Pure-JAX f32 reference mirroring the PyTorch module (eval mode)."""
    emb = jnp.take(word_vectors, token_ids, axis=0)          # (B, S, E)
    x = emb @ w_proj                                          # (B, S, H)
    for layer in range(2):
        g = jax.nn.sigmoid(x @ wg[layer] + bg[layer])
        t = jax.nn.relu(x @ wt[layer] + bt[layer])
        x = g * t + (1.0 - g) * x
    return x


def _make_params(key, V, E, H):
    keys = jax.random.split(key, 12)
    token_vocab = jax.random.normal(keys[1], (V, E), dtype=jnp.float32)

    def lin_w(k, fan_in, fan_out):
        bound = 1.0 / (fan_in ** 0.5)
        return jax.random.uniform(k, (fan_in, fan_out), jnp.float32, -bound, bound)

    def lin_b(k, fan_in, fan_out):
        bound = 1.0 / (fan_in ** 0.5)
        return jax.random.uniform(k, (fan_out,), jnp.float32, -bound, bound)

    w_proj = lin_w(keys[2], E, H)
    wt = [lin_w(keys[3], H, H), lin_w(keys[4], H, H)]
    bt = [lin_b(keys[5], H, H), lin_b(keys[6], H, H)]
    wg = [lin_w(keys[7], H, H), lin_w(keys[8], H, H)]
    bg = [lin_b(keys[9], H, H), lin_b(keys[10], H, H)]
    return keys[0], token_vocab, w_proj, wt, bt, wg, bg


def _run_case(key, B, S, V, E, H, atol=5e-2, rtol=5e-2):
    id_key, word_vectors, w_proj, wt, bt, wg, bg = _make_params(key, V, E, H)
    token_ids = jax.random.randint(id_key, (B, S), 0, V, dtype=jnp.int32)

    params = prepare_embedding_params(word_vectors, w_proj, wt, bt, wg, bg)
    out = embedding_forward(token_ids, params)
    out = jax.block_until_ready(out)

    ref = _reference_forward(token_ids, word_vectors, w_proj, wt, bt, wg, bg)
    assert out.shape == (B, S, H), out.shape
    out_f32 = out.astype(jnp.float32)
    max_err = float(jnp.abs(out_f32 - ref).max())
    # bf16 MXU inputs + bf16 output (f32 accumulation) => loosened tolerance.
    assert jnp.allclose(out_f32, ref, atol=atol, rtol=rtol), max_err


if __name__ == "__main__":
    # Small deterministic case: batch=2, seq=8, vocab=100, embed_dim=64, hidden=32.
    _run_case(jax.random.PRNGKey(0), B=2, S=8, V=100, E=64, H=32)
    # Larger case to exercise the multi-tile / row-padding / H-padding path
    # (N=300 -> tm=160, padded to 320, grid of 2; H=64 padded to 128 lanes).
    _run_case(jax.random.PRNGKey(1), B=3, S=100, V=300, E=96, H=64)
    print("KERNEL_OK")
</pallas_src>

<mosaic_0001>
module attributes {stable_mosaic.version = 11 : i64} {
  func.func @_embed_highway_kernel(%arg0: i32, %arg1: memref<16xi32, #tpu.memory_space<smem>>, %arg2: memref<100x128xf32, #tpu.memory_space<any>>, %arg3: memref<128x256xbf16, #tpu.memory_space<vmem>>, %arg4: memref<1x256xf32, #tpu.memory_space<vmem>>, %arg5: memref<128x256xbf16, #tpu.memory_space<vmem>>, %arg6: memref<1x256xf32, #tpu.memory_space<vmem>>, %arg7: memref<16x128xbf16, #tpu.memory_space<vmem>>, %arg8: memref<16x128xf32, #tpu.memory_space<vmem>>, %arg9: memref<1x!tpu.dma_semaphore, #tpu.memory_space<semaphore_mem>>) attributes {dimension_semantics = [#tpu.dimension_semantics<parallel>], iteration_bounds = array<i64: 1>, scalar_prefetch = 1 : i64, scratch_operands = 2 : i64, tpu.core_type = #tpu.core_type<tc>, window_params = [{}, {pipeline_mode = #tpu.pipeline_mode<synchronous>, transform_indices = @transform_1, window_bounds = array<i64: 128, 256>}, {pipeline_mode = #tpu.pipeline_mode<synchronous>, transform_indices = @transform_2, window_bounds = array<i64: 1, 256>}, {pipeline_mode = #tpu.pipeline_mode<synchronous>, transform_indices = @transform_3, window_bounds = array<i64: 128, 256>}, {pipeline_mode = #tpu.pipeline_mode<synchronous>, transform_indices = @transform_4, window_bounds = array<i64: 1, 256>}, {transform_indices = @transform_5, window_bounds = array<i64: 16, 128>}]} {
    %c16_i32 = arith.constant 16 : i32
    %0 = arith.muli %arg0, %c16_i32 : i32
    %c0_i32 = arith.constant 0 : i32
    %c16_i32_0 = arith.constant 16 : i32
    %1 = arith.addi %c0_i32, %c16_i32_0 : i32
    %c1_i32 = arith.constant 1 : i32
    scf.for %arg10 = %c0_i32 to %1 step %c1_i32  : i32 {
      %c1_i32_24 = arith.constant 1 : i32
      %46 = arith.muli %arg10, %c1_i32_24 : i32
      %c0_i32_25 = arith.constant 0 : i32
      %47 = arith.addi %c0_i32_25, %46 : i32
      %48 = arith.addi %0, %47 : i32
      %49 = arith.index_cast %48 : i32 to index
      %50 = memref.load %arg1[%49] : memref<16xi32, #tpu.memory_space<smem>>
      %c0_i32_26 = arith.constant 0 : i32
      %c0_i32_27 = arith.constant 0 : i32
      %51 = tpu.memref_slice %arg2[%50, %c0_i32_27] : memref<100x128xf32, #tpu.memory_space<any>> -> memref<1x128xf32, #tpu.memory_space<any>>
      %52 = tpu.memref_squeeze %51 : memref<1x128xf32, #tpu.memory_space<any>> -> memref<128xf32, #tpu.memory_space<any>>
      %c0_i32_28 = arith.constant 0 : i32
      %53 = tpu.memref_slice %arg8[%47, %c0_i32_28] : memref<16x128xf32, #tpu.memory_space<vmem>> -> memref<1x128xf32, #tpu.memory_space<vmem>>
      %54 = tpu.memref_squeeze %53 : memref<1x128xf32, #tpu.memory_space<vmem>> -> memref<128xf32, #tpu.memory_space<vmem>>
      %55 = tpu.memref_slice %arg9[%c0_i32_26] : memref<1x!tpu.dma_semaphore, #tpu.memory_space<semaphore_mem>> -> memref<1x!tpu.dma_semaphore, #tpu.memory_space<semaphore_mem>>
      %56 = tpu.memref_squeeze %55 : memref<1x!tpu.dma_semaphore, #tpu.memory_space<semaphore_mem>> -> memref<!tpu.dma_semaphore, #tpu.memory_space<semaphore_mem>>
      tpu.enqueue_dma source(%52 : memref<128xf32, #tpu.memory_space<any>>) target(%54 : memref<128xf32, #tpu.memory_space<vmem>>) target_semaphore(%56 : memref<!tpu.dma_semaphore, #tpu.memory_space<semaphore_mem>>)
    }
    %c16_i32_1 = arith.constant 16 : i32
    %c0_i32_2 = arith.constant 0 : i32
    %c16_i32_3 = arith.constant 16 : i32
    %2 = arith.addi %c0_i32_2, %c16_i32_3 : i32
    %c1_i32_4 = arith.constant 1 : i32
    scf.for %arg10 = %c0_i32_2 to %2 step %c1_i32_4  : i32 {
      %c1_i32_24 = arith.constant 1 : i32
      %46 = arith.muli %arg10, %c1_i32_24 : i32
      %c0_i32_25 = arith.constant 0 : i32
      %47 = arith.addi %c0_i32_25, %46 : i32
      %c0_i32_26 = arith.constant 0 : i32
      %c0_i32_27 = arith.constant 0 : i32
      %c0_i32_28 = arith.constant 0 : i32
      %48 = tpu.memref_slice %arg2[%c0_i32_26, %c0_i32_28] : memref<100x128xf32, #tpu.memory_space<any>> -> memref<1x128xf32, #tpu.memory_space<any>>
      %49 = tpu.memref_squeeze %48 : memref<1x128xf32, #tpu.memory_space<any>> -> memref<128xf32, #tpu.memory_space<any>>
      %c0_i32_29 = arith.constant 0 : i32
      %50 = tpu.memref_slice %arg8[%47, %c0_i32_29] : memref<16x128xf32, #tpu.memory_space<vmem>> -> memref<1x128xf32, #tpu.memory_space<vmem>>
      %51 = tpu.memref_squeeze %50 : memref<1x128xf32, #tpu.memory_space<vmem>> -> memref<128xf32, #tpu.memory_space<vmem>>
      %52 = tpu.memref_slice %arg9[%c0_i32_27] : memref<1x!tpu.dma_semaphore, #tpu.memory_space<semaphore_mem>> -> memref<1x!tpu.dma_semaphore, #tpu.memory_space<semaphore_mem>>
      %53 = tpu.memref_squeeze %52 : memref<1x!tpu.dma_semaphore, #tpu.memory_space<semaphore_mem>> -> memref<!tpu.dma_semaphore, #tpu.memory_space<semaphore_mem>>
      tpu.wait_dma2 semaphore(%53 : memref<!tpu.dma_semaphore, #tpu.memory_space<semaphore_mem>>) src(%49 : memref<128xf32, #tpu.memory_space<any>>) dst(%51 : memref<128xf32, #tpu.memory_space<vmem>>)
    }
    %c16_i32_5 = arith.constant 16 : i32
    %c0 = arith.constant 0 : index
    %c0_6 = arith.constant 0 : index
    %3 = vector.load %arg8[%c0, %c0_6] : memref<16x128xf32, #tpu.memory_space<vmem>>, vector<16x128xf32>
    %4 = arith.truncf %3 : vector<16x128xf32> to vector<16x128xbf16>
    %c0_7 = arith.constant 0 : index
    %c0_8 = arith.constant 0 : index
    %5 = vector.load %arg3[%c0_7, %c0_8] : memref<128x256xbf16, #tpu.memory_space<vmem>>, vector<128x256xbf16>
    %cst = arith.constant dense<0.000000e+00> : vector<16x256xf32>
    %6 = tpu.matmul %4, %5, %cst {dimension_numbers = #tpu.dot_dimension_numbers<[1], [0], [0], [1], [0, 0, 1, 1], [], []>} : vector<16x128xbf16>, vector<128x256xbf16>, vector<16x256xf32> -> vector<16x256xf32>
    %c0_9 = arith.constant 0 : index
    %c0_10 = arith.constant 0 : index
    %7 = vector.load %arg4[%c0_9, %c0_10] : memref<1x256xf32, #tpu.memory_space<vmem>>, vector<1x256xf32>
    %8 = vector.broadcast %7 : vector<1x256xf32> to vector<16x256xf32>
    %9 = arith.addf %6, %8 : vector<16x256xf32>
    %10 = vector.extract_strided_slice %9 {offsets = [0, 0], sizes = [16, 128], strides = [1, 1]} : vector<16x256xf32> to vector<16x128xf32>
    %11 = arith.negf %10 : vector<16x128xf32>
    %12 = math.exp %11 : vector<16x128xf32>
    %cst_11 = arith.constant 1.000000e+00 : f32
    %13 = vector.broadcast %cst_11 : f32 to vector<16x128xf32>
    %14 = arith.addf %13, %12 : vector<16x128xf32>
    %15 = arith.divf %13, %14 : vector<16x128xf32>
    %16 = vector.extract_strided_slice %9 {offsets = [0, 128], sizes = [16, 128], strides = [1, 1]} : vector<16x256xf32> to vector<16x128xf32>
    %cst_12 = arith.constant 0.000000e+00 : f32
    %17 = vector.broadcast %cst_12 : f32 to vector<16x128xf32>
    %18 = arith.maximumf %16, %17 : vector<16x128xf32>
    %19 = arith.mulf %15, %18 : vector<16x128xf32>
    %cst_13 = arith.constant 1.000000e+00 : f32
    %20 = vector.broadcast %cst_13 : f32 to vector<16x128xf32>
    %21 = arith.subf %20, %15 : vector<16x128xf32>
    %22 = arith.mulf %21, %3 : vector<16x128xf32>
    %23 = arith.addf %19, %22 : vector<16x128xf32>
    %24 = arith.truncf %23 : vector<16x128xf32> to vector<16x128xbf16>
    %c0_14 = arith.constant 0 : index
    %c0_15 = arith.constant 0 : index
    %25 = vector.load %arg5[%c0_14, %c0_15] : memref<128x256xbf16, #tpu.memory_space<vmem>>, vector<128x256xbf16>
    %cst_16 = arith.constant dense<0.000000e+00> : vector<16x256xf32>
    %26 = tpu.matmul %24, %25, %cst_16 {dimension_numbers = #tpu.dot_dimension_numbers<[1], [0], [0], [1], [0, 0, 1, 1], [], []>} : vector<16x128xbf16>, vector<128x256xbf16>, vector<16x256xf32> -> vector<16x256xf32>
    %c0_17 = arith.constant 0 : index
    %c0_18 = arith.constant 0 : index
    %27 = vector.load %arg6[%c0_17, %c0_18] : memref<1x256xf32, #tpu.memory_space<vmem>>, vector<1x256xf32>
    %28 = vector.broadcast %27 : vector<1x256xf32> to vector<16x256xf32>
    %29 = arith.addf %26, %28 : vector<16x256xf32>
    %30 = vector.extract_strided_slice %29 {offsets = [0, 0], sizes = [16, 128], strides = [1, 1]} : vector<16x256xf32> to vector<16x128xf32>
    %31 = arith.negf %30 : vector<16x128xf32>
    %32 = math.exp %31 : vector<16x128xf32>
    %cst_19 = arith.constant 1.000000e+00 : f32
    %33 = vector.broadcast %cst_19 : f32 to vector<16x128xf32>
    %34 = arith.addf %33, %32 : vector<16x128xf32>
    %35 = arith.divf %33, %34 : vector<16x128xf32>
    %36 = vector.extract_strided_slice %29 {offsets = [0, 128], sizes = [16, 128], strides = [1, 1]} : vector<16x256xf32> to vector<16x128xf32>
    %cst_20 = arith.constant 0.000000e+00 : f32
    %37 = vector.broadcast %cst_20 : f32 to vector<16x128xf32>
    %38 = arith.maximumf %36, %37 : vector<16x128xf32>
    %39 = arith.mulf %35, %38 : vector<16x128xf32>
    %cst_21 = arith.constant 1.000000e+00 : f32
    %40 = vector.broadcast %cst_21 : f32 to vector<16x128xf32>
    %41 = arith.subf %40, %35 : vector<16x128xf32>
    %42 = arith.mulf %41, %23 : vector<16x128xf32>
    %43 = arith.addf %39, %42 : vector<16x128xf32>
    %44 = arith.truncf %43 : vector<16x128xf32> to vector<16x128xbf16>
    %c0_22 = arith.constant 0 : index
    %c0_23 = arith.constant 0 : index
    %45 = vector.load %arg7[%c0_22, %c0_23] : memref<16x128xbf16, #tpu.memory_space<vmem>>, vector<16x128xbf16>
    tpu.vector_store %arg7[%c0_22, %c0_23], %44 {strides = array<i32>} : memref<16x128xbf16, #tpu.memory_space<vmem>>, vector<16x128xbf16>,
    return
  }
  func.func @transform_1(%arg0: i32, %arg1: memref<16xi32, #tpu.memory_space<smem>>) -> (i32, i32) {
    %c0_i32 = arith.constant 0 : i32
    %c0_i32_0 = arith.constant 0 : i32
    %c0_i32_1 = arith.constant 0 : i32
    return %c0_i32, %c0_i32_0 : i32, i32
  }
  func.func @transform_2(%arg0: i32, %arg1: memref<16xi32, #tpu.memory_space<smem>>) -> (i32, i32) {
    %c0_i32 = arith.constant 0 : i32
    %c0_i32_0 = arith.constant 0 : i32
    %c0_i32_1 = arith.constant 0 : i32
    return %c0_i32, %c0_i32_0 : i32, i32
  }
  func.func @transform_3(%arg0: i32, %arg1: memref<16xi32, #tpu.memory_space<smem>>) -> (i32, i32) {
    %c0_i32 = arith.constant 0 : i32
    %c0_i32_0 = arith.constant 0 : i32
    %c0_i32_1 = arith.constant 0 : i32
    return %c0_i32, %c0_i32_0 : i32, i32
  }
  func.func @transform_4(%arg0: i32, %arg1: memref<16xi32, #tpu.memory_space<smem>>) -> (i32, i32) {
    %c0_i32 = arith.constant 0 : i32
    %c0_i32_0 = arith.constant 0 : i32
    %c0_i32_1 = arith.constant 0 : i32
    return %c0_i32, %c0_i32_0 : i32, i32
  }
  func.func @transform_5(%arg0: i32, %arg1: memref<16xi32, #tpu.memory_space<smem>>) -> (i32, i32) {
    %c0_i32 = arith.constant 0 : i32
    %c0_i32_0 = arith.constant 0 : i32
    return %arg0, %c0_i32 : i32, i32
  }
}

</mosaic_0001>

<llo_original>
// kernel: tpu_custom_call.1
$region0: #{tpu_custom_call.1}
  #allocation0 [shape = 'u32[]', space=smem, size = 0x4, offset = 0x4, fixed_abs, tag = 'smem constant byte address 0x4 - core index']
  #allocation1 [shape = 'u32[144,128]{1,0:T(1,128)}', space=vmem, size = 0x12000, scoped, tag = 'internal scratch']
  #allocation2 [shape = 'f32[16,128]{1,0:T(8,128)}', space=vmem, size = 0x2000, scoped, tag = 'scratch operand']
  #allocation3 [shape = 's32[1]{0}', space=sflag, size = 0x4, scoped, tag = 'scratch operand']
  #allocation4 [shape = 's32[1]{0}', space=sflag, size = 0x4, scoped, tag = 'scoped memory for tpu_custom_call.1']
  #allocation5 [shape = 'u8[512]{0}', space=smem, size = 0x200, scoped, tag = 'prefetched SMEM operand 0']
  #allocation12 [shape = 's32[]', space=sflag, size = 0x4, offset = 0, fixed_abs, tag = 'sflag constant byte address 0x0 - dummy sync flag']
  #allocation13 [shape = 's32[]', space=sflag, size = 0x4, offset = 0, fixed_abs, tag = 'sflag constant byte address 0x0 - dummy sync flag']
  #allocation14 [shape = 'u32[]', space=smem, size = 0x4, offset = 0x44, fixed_abs, tag = 'smem constant byte address 0x44 - assertion arg 0']
  #allocation15 [shape = 'u32[]', space=smem, size = 0x4, offset = 0x48, fixed_abs, tag = 'smem constant byte address 0x48 - assertion arg 1']
  %s0 = inlined_call_operand.hbm [shape: s32[16], index: 0, kind: input, shape index: {}]
  %s1 = inlined_call_operand.hbm [shape: f32[100,128], index: 1, kind: input, shape index: {}]
  %s2 = inlined_call_operand.hbm [shape: bf16[128,256], index: 2, kind: input, shape index: {}]
  %s3 = inlined_call_operand.vmem [shape: f32[1,256], index: 3, kind: input, shape index: {}]
  %s4 = inlined_call_operand.hbm [shape: bf16[128,256], index: 4, kind: input, shape index: {}]
  %s5 = inlined_call_operand.vmem [shape: f32[1,256], index: 5, kind: input, shape index: {}]
  %s6 = inlined_call_operand.hbm [shape: bf16[16,128], index: 6, kind: output, shape index: {}]
  %s7 = sld [smem:[#allocation0]]
  $region52: #{tpu_custom_call.1} parent=0
    _
  %s9 = ssub.s32 1, %s7
  %s10 = scalar_select 0, %s9, %s7
  %12 = dma.hbm_to_smem %s0, 16, [#allocation5], [#allocation4]
  %13 = dma.done [#allocation4], 16
  %14 = sfence
  $region1: #{tpu_custom_call.1} parent=0
    #allocation6 [shape = 'u8[65536]{0}', space=vmem, size = 0x10000, scoped, tag = 'input window, operand 2, single buffered']
    #allocation7 [shape = 's32[1]{0}', space=sflag, size = 0x4, scoped, tag = 'scoped memory for tpu_custom_call.1']
    #allocation8 [shape = 's32[1]{0}', space=sflag, size = 0x4, scoped, tag = 'scoped memory for tpu_custom_call.1']
    #allocation9 [shape = 'u8[65536]{0}', space=vmem, size = 0x10000, scoped, tag = 'input window, operand 4, single buffered']
    #allocation10 [shape = 's32[1]{0}', space=sflag, size = 0x4, scoped, tag = 'scoped memory for tpu_custom_call.1']
    #allocation11 [shape = 'u8[4096]{0}', space=vmem, size = 0x1000, scoped, tag = 'output window, operand 0, single buffered']
    %15 = vsyncpa [#allocation7], 0
    %16 = vsyncpa [#allocation10], 0
    %17 = vsyncpa [#allocation8], 0
    // Predicated region
    $region2: #{tpu_custom_call.1} parent=1 // pred_check
      _
    $region3: #{tpu_custom_call.1} parent=1 // pred_check_branch
      %19 = sbr.rel (0) target = $region5
    $region4: #{tpu_custom_call.1} parent=1 // pred_region
      %s21 = ssub.s32 2048, 2048
      %22 = vsyncadd [#allocation7], %s21
      %s23 = sshll.u32 [#allocation6], 4
      %s24 = int_to_ptr.vmem [resolvable:$true] %s23
      %29 = dma.hbm_to_vmem [thread:$0]  %s2, 2048, %s24, [#allocation7], 128, 128, 8
    $region5: #{tpu_custom_call.1} parent=1 // pred_fallthru
      _
    // Predicated region
    $region6: #{tpu_custom_call.1} parent=1 // pred_check
      _
    $region7: #{tpu_custom_call.1} parent=1 // pred_check_branch
      %31 = sbr.rel (0) target = $region9
    $region8: #{tpu_custom_call.1} parent=1 // pred_region
      _
    $region9: #{tpu_custom_call.1} parent=1 // pred_fallthru
      _
    // Predicated region
    $region10: #{tpu_custom_call.1} parent=1 // pred_check
      _
    $region11: #{tpu_custom_call.1} parent=1 // pred_check_branch
      %33 = sbr.rel (0) target = $region13
    $region12: #{tpu_custom_call.1} parent=1 // pred_region
      %s35 = ssub.s32 2048, 2048
      %36 = vsyncadd [#allocation10], %s35
      %s37 = sshll.u32 [#allocation9], 4
      %s38 = int_to_ptr.vmem [resolvable:$true] %s37
      %43 = dma.hbm_to_vmem [thread:$0]  %s4, 2048, %s38, [#allocation10], 128, 128, 8
    $region13: #{tpu_custom_call.1} parent=1 // pred_fallthru
      _
    // Predicated region
    $region14: #{tpu_custom_call.1} parent=1 // pred_check
      _
    $region15: #{tpu_custom_call.1} parent=1 // pred_check_branch
      %45 = sbr.rel (0) target = $region17
    $region16: #{tpu_custom_call.1} parent=1 // pred_region
      _
    $region17: #{tpu_custom_call.1} parent=1 // pred_fallthru
      _
    // Predicated region
    $region18: #{tpu_custom_call.1} parent=1 // pred_check
      _
    $region19: #{tpu_custom_call.1} parent=1 // pred_check_branch
      %47 = sbr.rel (0) target = $region21
    $region20: #{tpu_custom_call.1} parent=1 // pred_region
      %48 = dma.done [#allocation7], 2048
    $region21: #{tpu_custom_call.1} parent=1 // pred_fallthru
      _
    // Predicated region
    $region22: #{tpu_custom_call.1} parent=1 // pred_check
      _
    $region23: #{tpu_custom_call.1} parent=1 // pred_check_branch
      %50 = sbr.rel (0) target = $region25
    $region24: #{tpu_custom_call.1} parent=1 // pred_region
      %51 = dma.done [#allocation10], 2048
    $region25: #{tpu_custom_call.1} parent=1 // pred_fallthru
      _
    %s53 = smul.u32 0, 16
    loop: start=0, step=1, limit=16
    $region26: #{tpu_custom_call.1} parent=1 // loop_pre_header
      _
    $region27: #{tpu_custom_call.1} parent=1 // loop_header
      %s55 = sphi 0, %s59
      %p56 = scmp.ge.s32.totalorder %s55, 16
    $region28: #{tpu_custom_call.1} parent=1 // loop_header_branch
      %58 = sbr.rel (%p56) target = $region32
    $region29: #{tpu_custom_call.1} parent=1 // loop_body
      %s60 = sadd.s32 %s53, %s55
      %s61 = sld [smem:[#allocation5 + %s60]]
      %s62 = smul.addr %s61, 16
      %s63 = scalar_lea.hbm %s1, %s62
      %s64 = scalar_lea.vmem [#allocation2], %s55
      // Predicated region
      $region33: #{tpu_custom_call.1} parent=29 // pred_check
        _
      $region34: #{tpu_custom_call.1} parent=29 // pred_check_branch
        %66 = sbr.rel target = $region36
      $region35: #{tpu_custom_call.1} parent=29 // pred_region
        %67 = sst [smem:[#allocation14]] [#allocation13]
        %68 = sst [smem:[#allocation15]] [#allocation12]
      $region36: #{tpu_custom_call.1} parent=29 // pred_fallthru
        _
      %70 = shalt.err (0)
      %s72 = sshll.u32 %s64, 4
      %s73 = int_to_ptr.vmem [resolvable:$true] %s72
      %75 = dma.hbm_to_vmem [thread:$0]  %s63, 16, %s73, [#allocation3]
    $region30: #{tpu_custom_call.1} parent=1 // loop_footer
      %s59 = sadd.s32 1, %s55
    $region31: #{tpu_custom_call.1} parent=1 // loop_footer_branch
      %54 = sbr.rel target = $region27
    $region32: #{tpu_custom_call.1} parent=1 // loop_exit
      _
    loop: start=0, step=1, limit=16
    $region37: #{tpu_custom_call.1} parent=1 // loop_pre_header
      _
    $region38: #{tpu_custom_call.1} parent=1 // loop_header
      %s77 = sphi 0, %s81
      %p78 = scmp.ge.s32.totalorder %s77, 16
    $region39: #{tpu_custom_call.1} parent=1 // loop_header_branch
      %80 = sbr.rel (%p78) target = $region43
    $region40: #{tpu_custom_call.1} parent=1 // loop_body
      %83 = dma.done [#allocation3], 16
    $region41: #{tpu_custom_call.1} parent=1 // loop_footer
      %s81 = sadd.s32 1, %s77
    $region42: #{tpu_custom_call.1} parent=1 // loop_footer_branch
      %76 = sbr.rel target = $region38
    $region43: #{tpu_custom_call.1} parent=1 // loop_exit
      _
    %v84 = vld [vmem:[#allocation2] sm:$0xff]
    %v85 = vld [vmem:[#allocation2 + $0x8] sm:$0xff]
    %v86 = vpack.c.bf16 %v85, %v84
    %v87 = vld [vmem:[#allocation6] sm:$0xff]
    %v88 = vld [vmem:[#allocation6 + $0x8] sm:$0xff]
    %v89 = vld [vmem:[#allocation6 + $0x10] sm:$0xff]
    %v90 = vld [vmem:[#allocation6 + $0x18] sm:$0xff]
    %v91 = vld [vmem:[#allocation6 + $0x20] sm:$0xff]
    %v92 = vld [vmem:[#allocation6 + $0x28] sm:$0xff]
    %v93 = vld [vmem:[#allocation6 + $0x30] sm:$0xff]
    %v94 = vld [vmem:[#allocation6 + $0x38] sm:$0xff]
    %v95 = vld [vmem:[#allocation6 + $0x40] sm:$0xff]
    %v96 = vld [vmem:[#allocation6 + $0x48] sm:$0xff]
    %v97 = vld [vmem:[#allocation6 + $0x50] sm:$0xff]
    %v98 = vld [vmem:[#allocation6 + $0x58] sm:$0xff]
    %v99 = vld [vmem:[#allocation6 + $0x60] sm:$0xff]
    %v100 = vld [vmem:[#allocation6 + $0x68] sm:$0xff]
    %v101 = vld [vmem:[#allocation6 + $0x70] sm:$0xff]
    %v102 = vld [vmem:[#allocation6 + $0x78] sm:$0xff]
    %v103 = vld [vmem:[%s3] sm:$0x3]
    %v105 = vlaneseq
    %v106 = vshrl.u32 %v105, 7
    %v107 = vsub.s32 0, %v106
    %v108 = vrot.slane %v103, %v107
    %v109 = vlaneseq
    %v110 = vshrl.u32 %v109, 7
    %v111 = vsub.s32 1, %v110
    %v112 = vrot.slane %v103, %v111
    %v131 = vunpack.c.l.b16 %v87
    %v132 = vunpack.c.h.b16 %v87
    %v133 = vunpack.c.l.b16 %v88
    %v134 = vunpack.c.h.b16 %v88
    %v135 = vunpack.c.l.b16 %v89
    %v136 = vunpack.c.h.b16 %v89
    %v137 = vunpack.c.l.b16 %v90
    %v138 = vunpack.c.h.b16 %v90
    %v139 = vunpack.c.l.b16 %v91
    %v140 = vunpack.c.h.b16 %v91
    %v141 = vunpack.c.l.b16 %v92
    %v142 = vunpack.c.h.b16 %v92
    %v143 = vunpack.c.l.b16 %v93
    %v144 = vunpack.c.h.b16 %v93
    %v145 = vunpack.c.l.b16 %v94
    %v146 = vunpack.c.h.b16 %v94
    %v147 = vunpack.c.l.b16 %v95
    %v148 = vunpack.c.h.b16 %v95
    %v149 = vunpack.c.l.b16 %v96
    %v150 = vunpack.c.h.b16 %v96
    %v151 = vunpack.c.l.b16 %v97
    %v152 = vunpack.c.h.b16 %v97
    %v153 = vunpack.c.l.b16 %v98
    %v154 = vunpack.c.h.b16 %v98
    %v155 = vunpack.c.l.b16 %v99
    %v156 = vunpack.c.h.b16 %v99
    %v157 = vunpack.c.l.b16 %v100
    %v158 = vunpack.c.h.b16 %v100
    %v159 = vunpack.c.l.b16 %v101
    %v160 = vunpack.c.h.b16 %v101
    %v161 = vunpack.c.l.b16 %v102
    %v162 = vunpack.c.h.b16 %v102
    %v163 = vpack.c.b16 %v133, %v131
    %v164 = vpack.c.b16 %v134, %v132
    %v165 = vpack.c.b16 %v137, %v135
    %v166 = vpack.c.b16 %v138, %v136
    %v167 = vpack.c.b16 %v141, %v139
    %v168 = vpack.c.b16 %v142, %v140
    %v169 = vpack.c.b16 %v145, %v143
    %v170 = vpack.c.b16 %v146, %v144
    %v171 = vpack.c.b16 %v149, %v147
    %v172 = vpack.c.b16 %v150, %v148
    %v173 = vpack.c.b16 %v153, %v151
    %v174 = vpack.c.b16 %v154, %v152
    %v175 = vpack.c.b16 %v157, %v155
    %v176 = vpack.c.b16 %v158, %v156
    %v177 = vpack.c.b16 %v161, %v159
    %v178 = vpack.c.b16 %v162, %v160
    %195 = vmatprep.subr.bf16.mxu0 %v164
    %196 = vmatpush1.bf16.msra.mxu0 %v163
    %197 = vmatprep.subr.bf16.mxu0 %v166
    %198 = vmatpush1.bf16.msra.mxu0 %v165
    %199 = vmatprep.subr.bf16.mxu0 %v168
    %200 = vmatpush1.bf16.msra.mxu0 %v167
    %201 = vmatprep.subr.bf16.mxu0 %v170
    %202 = vmatpush1.bf16.msra.mxu0 %v169
    %203 = vmatprep.subr.bf16.mxu0 %v172
    %204 = vmatpush1.bf16.msra.mxu0 %v171
    %205 = vmatprep.subr.bf16.mxu0 %v174
    %206 = vmatpush1.bf16.msra.mxu0 %v173
    %207 = vmatprep.subr.bf16.mxu0 %v176
    %208 = vmatpush1.bf16.msra.mxu0 %v175
    %209 = vmatprep.subr.bf16.mxu0 %v178
    %210 = vmatpush1.bf16.msra.mxu0 %v177
    %211 = vmatprep.subr.bf16.mxu0 0
    %212 = vmatpush1.bf16.msra.mxu0 0
    %213 = vmatprep.subr.bf16.mxu0 0
    %214 = vmatpush1.bf16.msra.mxu0 0
    %215 = vmatprep.subr.bf16.mxu0 0
    %216 = vmatpush1.bf16.msra.mxu0 0
    %217 = vmatprep.subr.bf16.mxu0 0
    %218 = vmatpush1.bf16.msra.mxu0 0
    %219 = vmatprep.subr.bf16.mxu0 0
    %220 = vmatpush1.bf16.msra.mxu0 0
    %221 = vmatprep.subr.bf16.mxu0 0
    %222 = vmatpush1.bf16.msra.mxu0 0
    %223 = vmatprep.subr.bf16.mxu0 0
    %224 = vmatpush1.bf16.msra.mxu0 0
    %225 = vmatprep.subr.bf16.mxu0 0
    %226 = vmatpush1.bf16.msra.mxu0 0
    %227 = vmatprep.mubr.bf16.mxu0 0
    %228 = vmatmul.mubr.bf16.gmra.mrb[0].mxu0 %v86
    %v229 = vpop.f32.mrb[0].mxu0
    %v230 = vadd.f32 %v108, %v229
    %v231 = vpop.f32.mrb[0].mxu0
    %v232 = vadd.f32 %v112, %v231
    %v233 = vpop.f32.mrb[0].mxu0
    %v234 = vadd.f32 %v108, %v233
    %v235 = vpop.f32.mrb[0].mxu0
    %v236 = vadd.f32 %v112, %v235
    %237 = vdwg.mxu0
    %v238 = vxor.u32 %v230, 2147483648
    %v239 = vxor.u32 %v234, 2147483648
    %v240 = vmul.f32 %v238, 1.442695
    %v241 = vpow.pop %v240
    %v242 = vmul.f32 %v239, 1.442695
    %v243 = vpow.pop %v242
    %v244 = vadd.f32 %v241, 1.0
    %v245 = vadd.f32 %v243, 1.0
    %v246 = vrcp.pop %v244
    %v247 = vmul.f32 1.0, %v246
    %v248 = vrcp.pop %v245
    %v249 = vmul.f32 1.0, %v248
    %v250 = vmax.f32 %v232, 0.0
    %v251 = vmax.f32 %v236, 0.0
    %v252 = vmul.f32 %v247, %v250
    %v253 = vmul.f32 %v249, %v251
    %v254 = vsub.f32 1.0, %v247
    %v255 = vsub.f32 1.0, %v249
    %v256 = vmul.f32 %v254, %v84
    %v257 = vmul.f32 %v255, %v85
    %v258 = vadd.f32 %v252, %v256
    %v259 = vadd.f32 %v253, %v257
    %v260 = vpack.c.bf16 %v259, %v258
    %v261 = vld [vmem:[#allocation9] sm:$0xff]
    %v262 = vld [vmem:[#allocation9 + $0x8] sm:$0xff]
    %v263 = vld [vmem:[#allocation9 + $0x10] sm:$0xff]
    %v264 = vld [vmem:[#allocation9 + $0x18] sm:$0xff]
    %v265 = vld [vmem:[#allocation9 + $0x20] sm:$0xff]
    %v266 = vld [vmem:[#allocation9 + $0x28] sm:$0xff]
    %v267 = vld [vmem:[#allocation9 + $0x30] sm:$0xff]
    %v268 = vld [vmem:[#allocation9 + $0x38] sm:$0xff]
    %v269 = vld [vmem:[#allocation9 + $0x40] sm:$0xff]
    %v270 = vld [vmem:[#allocation9 + $0x48] sm:$0xff]
    %v271 = vld [vmem:[#allocation9 + $0x50] sm:$0xff]
    %v272 = vld [vmem:[#allocation9 + $0x58] sm:$0xff]
    %v273 = vld [vmem:[#allocation9 + $0x60] sm:$0xff]
    %v274 = vld [vmem:[#allocation9 + $0x68] sm:$0xff]
    %v275 = vld [vmem:[#allocation9 + $0x70] sm:$0xff]
    %v276 = vld [vmem:[#allocation9 + $0x78] sm:$0xff]
    %v277 = vld [vmem:[%s5] sm:$0x3]
    %v279 = vlaneseq
    %v280 = vshrl.u32 %v279, 7
    %v281 = vsub.s32 0, %v280
    %v282 = vrot.slane %v277, %v281
    %v283 = vlaneseq
    %v284 = vshrl.u32 %v283, 7
    %v285 = vsub.s32 1, %v284
    %v286 = vrot.slane %v277, %v285
    %v305 = vunpack.c.l.b16 %v261
    %v306 = vunpack.c.h.b16 %v261
    %v307 = vunpack.c.l.b16 %v262
    %v308 = vunpack.c.h.b16 %v262
    %v309 = vunpack.c.l.b16 %v263
    %v310 = vunpack.c.h.b16 %v263
    %v311 = vunpack.c.l.b16 %v264
    %v312 = vunpack.c.h.b16 %v264
    %v313 = vunpack.c.l.b16 %v265
    %v314 = vunpack.c.h.b16 %v265
    %v315 = vunpack.c.l.b16 %v266
    %v316 = vunpack.c.h.b16 %v266
    %v317 = vunpack.c.l.b16 %v267
    %v318 = vunpack.c.h.b16 %v267
    %v319 = vunpack.c.l.b16 %v268
    %v320 = vunpack.c.h.b16 %v268
    %v321 = vunpack.c.l.b16 %v269
    %v322 = vunpack.c.h.b16 %v269
    %v323 = vunpack.c.l.b16 %v270
    %v324 = vunpack.c.h.b16 %v270
    %v325 = vunpack.c.l.b16 %v271
    %v326 = vunpack.c.h.b16 %v271
    %v327 = vunpack.c.l.b16 %v272
    %v328 = vunpack.c.h.b16 %v272
    %v329 = vunpack.c.l.b16 %v273
    %v330 = vunpack.c.h.b16 %v273
    %v331 = vunpack.c.l.b16 %v274
    %v332 = vunpack.c.h.b16 %v274
    %v333 = vunpack.c.l.b16 %v275
    %v334 = vunpack.c.h.b16 %v275
    %v335 = vunpack.c.l.b16 %v276
    %v336 = vunpack.c.h.b16 %v276
    %v337 = vpack.c.b16 %v307, %v305
    %v338 = vpack.c.b16 %v308, %v306
    %v339 = vpack.c.b16 %v311, %v309
    %v340 = vpack.c.b16 %v312, %v310
    %v341 = vpack.c.b16 %v315, %v313
    %v342 = vpack.c.b16 %v316, %v314
    %v343 = vpack.c.b16 %v319, %v317
    %v344 = vpack.c.b16 %v320, %v318
    %v345 = vpack.c.b16 %v323, %v321
    %v346 = vpack.c.b16 %v324, %v322
    %v347 = vpack.c.b16 %v327, %v325
    %v348 = vpack.c.b16 %v328, %v326
    %v349 = vpack.c.b16 %v331, %v329
    %v350 = vpack.c.b16 %v332, %v330
    %v351 = vpack.c.b16 %v335, %v333
    %v352 = vpack.c.b16 %v336, %v334
    %369 = vmatprep.subr.bf16.mxu0 %v338
    %370 = vmatpush1.bf16.msra.mxu0 %v337
    %371 = vmatprep.subr.bf16.mxu0 %v340
    %372 = vmatpush1.bf16.msra.mxu0 %v339
    %373 = vmatprep.subr.bf16.mxu0 %v342
    %374 = vmatpush1.bf16.msra.mxu0 %v341
    %375 = vmatprep.subr.bf16.mxu0 %v344
    %376 = vmatpush1.bf16.msra.mxu0 %v343
    %377 = vmatprep.subr.bf16.mxu0 %v346
    %378 = vmatpush1.bf16.msra.mxu0 %v345
    %379 = vmatprep.subr.bf16.mxu0 %v348
    %380 = vmatpush1.bf16.msra.mxu0 %v347
    %381 = vmatprep.subr.bf16.mxu0 %v350
    %382 = vmatpush1.bf16.msra.mxu0 %v349
    %383 = vmatprep.subr.bf16.mxu0 %v352
    %384 = vmatpush1.bf16.msra.mxu0 %v351
    %385 = vmatprep.subr.bf16.mxu0 0
    %386 = vmatpush1.bf16.msra.mxu0 0
    %387 = vmatprep.subr.bf16.mxu0 0
    %388 = vmatpush1.bf16.msra.mxu0 0
    %389 = vmatprep.subr.bf16.mxu0 0
    %390 = vmatpush1.bf16.msra.mxu0 0
    %391 = vmatprep.subr.bf16.mxu0 0
    %392 = vmatpush1.bf16.msra.mxu0 0
    %393 = vmatprep.subr.bf16.mxu0 0
    %394 = vmatpush1.bf16.msra.mxu0 0
    %395 = vmatprep.subr.bf16.mxu0 0
    %396 = vmatpush1.bf16.msra.mxu0 0
    %397 = vmatprep.subr.bf16.mxu0 0
    %398 = vmatpush1.bf16.msra.mxu0 0
    %399 = vmatprep.subr.bf16.mxu0 0
    %400 = vmatpush1.bf16.msra.mxu0 0
    %401 = vmatprep.mubr.bf16.mxu0 0
    %402 = vmatmul.mubr.bf16.gmra.mrb[0].mxu0 %v260
    %v403 = vpop.f32.mrb[0].mxu0
    %v404 = vadd.f32 %v282, %v403
    %v405 = vpop.f32.mrb[0].mxu0
    %v406 = vadd.f32 %v286, %v405
    %v407 = vpop.f32.mrb[0].mxu0
    %v408 = vadd.f32 %v282, %v407
    %v409 = vpop.f32.mrb[0].mxu0
    %v410 = vadd.f32 %v286, %v409
    %411 = vdwg.mxu0
    %v412 = vxor.u32 %v404, 2147483648
    %v413 = vxor.u32 %v408, 2147483648
    %v414 = vmul.f32 %v412, 1.442695
    %v415 = vpow.pop %v414
    %v416 = vmul.f32 %v413, 1.442695
    %v417 = vpow.pop %v416
    %v418 = vadd.f32 %v415, 1.0
    %v419 = vadd.f32 %v417, 1.0
    %v420 = vrcp.pop %v418
    %v421 = vmul.f32 1.0, %v420
    %v422 = vrcp.pop %v419
    %v423 = vmul.f32 1.0, %v422
    %v424 = vmax.f32 %v406, 0.0
    %v425 = vmax.f32 %v410, 0.0
    %v426 = vmul.f32 %v421, %v424
    %v427 = vmul.f32 %v423, %v425
    %v428 = vsub.f32 1.0, %v421
    %v429 = vsub.f32 1.0, %v423
    %v430 = vmul.f32 %v428, %v258
    %v431 = vmul.f32 %v429, %v259
    %v432 = vadd.f32 %v426, %v430
    %v433 = vadd.f32 %v427, %v431
    %v434 = vpack.c.bf16 %v433, %v432
    %v436 = vunpack.c.l.b16 %v434
    %v437 = vunpack.c.h.b16 %v434
    %v438 = vpack.c.b16 %v436, %v436
    %v439 = vpack.c.b16 %v437, %v437
    %442 = vst [vmem:[#allocation11] sm:$0xf] %v438
    %443 = vst [vmem:[#allocation11 + $0x4] sm:$0xf] %v439
    // Predicated region
    $region44: #{tpu_custom_call.1} parent=1 // pred_check
      _
    $region45: #{tpu_custom_call.1} parent=1 // pred_check_branch
      %445 = sbr.rel (0) target = $region47
    $region46: #{tpu_custom_call.1} parent=1 // pred_region
      %s447 = ssub.s32 128, 128
      %448 = vsyncadd [#allocation8], %s447
      %s449 = sshll.u32 [#allocation11], 4
      %s450 = int_to_ptr.vmem [resolvable:$true] %s449
      %455 = dma.vmem_to_hbm [thread:$0]  %s450, 128, %s6, [#allocation8], 64, 64, 4
    $region47: #{tpu_custom_call.1} parent=1 // pred_fallthru
      _
    // Predicated region
    $region48: #{tpu_custom_call.1} parent=1 // pred_check
      _
    $region49: #{tpu_custom_call.1} parent=1 // pred_check_branch
      %457 = sbr.rel (0) target = $region51
    $region50: #{tpu_custom_call.1} parent=1 // pred_region
      %458 = dma.done [#allocation8], 128
    $region51: #{tpu_custom_call.1} parent=1 // pred_fallthru
      _
    %459 = vsyncpa [#allocation7], 1
    %460 = vsyncpa [#allocation10], 1
    %461 = vsyncpa [#allocation8], 1
  %462 = vsyncmov [#allocation3]
  %s463 = vpop.sfrf %462
  %p464 = scmp.eq.s32.totalorder %s463, 0
  %p465 = pneg %p464
  %467 = shalt.err (%p465)

</llo_original>
